<compile_context>
chip_gen: v7x
topology: tpu7x:2x2x1
jax: 0.10.0
libtpu: 0.0.40
codegen_flags: <defaults>
</compile_context>

<pallas_src>
import jax
import jax.numpy as jnp
from jax.experimental import pallas as pl
from jax.experimental.pallas import tpu as pltpu


def _round_up(x: int, m: int) -> int:
    return -(-x // m) * m


def _critic_kernel(x_ref, w1_ref, b1_ref, w2_ref, b2_ref, wq_ref, bq_ref, q_ref):
    # fc1 + relu  (bf16 x bf16 -> f32 accumulate on the MXU)
    h1 = jnp.dot(x_ref[...], w1_ref[...], preferred_element_type=jnp.float32)
    h1 = jnp.maximum(h1 + b1_ref[...], 0.0)
    # fc2 + relu
    h2 = jnp.dot(h1.astype(jnp.bfloat16), w2_ref[...],
                 preferred_element_type=jnp.float32)
    h2 = jnp.maximum(h2 + b2_ref[...], 0.0)
    # q head: N=1 matmul replaced by a VPU multiply + cross-lane (XLU) reduction.
    q = jnp.sum(h2 * wq_ref[...], axis=-1, keepdims=True) + bq_ref[...]
    # Lane-dense store: broadcast q across the 128-lane output slab (unmasked vst).
    q_ref[...] = jnp.broadcast_to(q, q_ref.shape).astype(q_ref.dtype)


@jax.jit
def critic_forward(state, action, params):
    """state: [B, input_dims], action: [B, action_dims] -> q: [B, 1] (float32)."""
    w1, b1, w2, b2, wq, bq = (
        params["w1"], params["b1"], params["w2"], params["b2"],
        params["wq"], params["bq"],
    )
    b = state.shape[0]
    d_in = state.shape[1] + action.shape[1]
    k_pad = w1.shape[0]           # fc1 input dim, padded to a multiple of 128
    f1 = w1.shape[1]
    f2 = w2.shape[1]

    # Batch tile: as large as fits comfortably in VMEM, multiple of 16 (bf16 sublane
    # packing).  Small batches collapse to a single full-array block.
    tb = min(512, _round_up(b, 16))
    b_pad = _round_up(b, tb)

    # Assemble the concatenated input once, zero-padded to [b_pad, k_pad], in bf16.
    x = jnp.concatenate([state, action], axis=1).astype(jnp.bfloat16)
    x = jnp.pad(x, ((0, b_pad - b), (0, k_pad - d_in)))

    grid = (b_pad // tb,)

    q_slab = pl.pallas_call(
        _critic_kernel,
        out_shape=jax.ShapeDtypeStruct((b_pad, 128), jnp.float32),
        grid=grid,
        in_specs=[
            pl.BlockSpec((tb, k_pad), lambda i: (i, 0)),   # x: tiled over batch
            pl.BlockSpec((k_pad, f1), lambda i: (0, 0)),   # w1: VMEM-resident
            pl.BlockSpec((1, f1),     lambda i: (0, 0)),   # b1
            pl.BlockSpec((f1, f2),    lambda i: (0, 0)),   # w2: VMEM-resident
            pl.BlockSpec((1, f2),     lambda i: (0, 0)),   # b2
            pl.BlockSpec((1, f2),     lambda i: (0, 0)),   # wq (row vector)
            pl.BlockSpec((1, 1),      lambda i: (0, 0)),   # bq
        ],
        out_specs=pl.BlockSpec((tb, 128), lambda i: (i, 0)),
        compiler_params=pltpu.CompilerParams(
            dimension_semantics=("parallel",)),
    )(x, w1, b1, w2, b2, wq, bq)

    return q_slab[:b, :1]


def init_critic_params(key, input_dims, action_dims, fc1_dims=256, fc2_dims=256):
    """Deterministic init mimicking nn.Linear default (U[-1/sqrt(fan_in), 1/sqrt(fan_in)]).

    Weights are stored as [in_features, out_features]; w1's input dim is zero-padded
    up to a multiple of 128 so the kernel sees a lane-aligned K.  w1/w2 are bf16
    (MXU-native), biases and the q-head row vector stay f32 (VPU path)."""
    d_in = input_dims + action_dims
    d_in_pad = _round_up(d_in, 128)
    k1, k2, k3, k4, k5, k6 = jax.random.split(key, 6)

    def u(k, shape, fan_in):
        bound = 1.0 / jnp.sqrt(jnp.float32(fan_in))
        return jax.random.uniform(k, shape, jnp.float32, -bound, bound)

    w1 = jnp.zeros((d_in_pad, fc1_dims), jnp.float32).at[:d_in].set(
        u(k1, (d_in, fc1_dims), d_in))

    return {
        "w1": w1.astype(jnp.bfloat16),
        "b1": u(k2, (1, fc1_dims), d_in),
        "w2": u(k3, (fc1_dims, fc2_dims), fc1_dims).astype(jnp.bfloat16),
        "b2": u(k4, (1, fc2_dims), fc1_dims),
        "wq": u(k5, (1, fc2_dims), fc2_dims),   # row vector for the reduction head
        "bq": u(k6, (1, 1), fc2_dims),
    }


if __name__ == "__main__":
    key = jax.random.PRNGKey(0)
    k_params, k_state, k_action = jax.random.split(key, 3)

    batch = 2
    input_dims = (8,)   # CriticNN(input_dims=(8,), ...)
    action_dims = 4
    fc1_dims = fc2_dims = 256

    params = init_critic_params(k_params, input_dims[0], action_dims,
                                fc1_dims, fc2_dims)

    state = jax.random.normal(k_state, (batch, input_dims[0]), jnp.float32)
    action = jax.random.normal(k_action, (batch, action_dims), jnp.float32)

    q = critic_forward(state, action, params)
    jax.block_until_ready(q)

    # Pure-JAX reference of the same forward pass (mirroring the bf16 weight /
    # activation casts, f32 accumulation).
    x = jnp.concatenate([state, action], axis=1)
    d_in = x.shape[1]
    x_bf = x.astype(jnp.bfloat16).astype(jnp.float32)
    w1_eff = params["w1"][:d_in].astype(jnp.float32)
    h1 = jnp.maximum(x_bf @ w1_eff + params["b1"], 0.0)
    h1_bf = h1.astype(jnp.bfloat16).astype(jnp.float32)
    h2 = jnp.maximum(h1_bf @ params["w2"].astype(jnp.float32) + params["b2"], 0.0)
    q_ref = jnp.sum(h2 * params["wq"], axis=-1, keepdims=True) + params["bq"]

    assert q.shape == (batch, 1)
    assert jnp.allclose(q, q_ref, atol=2e-3, rtol=2e-3), (
        f"max abs err {jnp.max(jnp.abs(q - q_ref))}")

    print("KERNEL_OK")
</pallas_src>

<mosaic_0001>
module attributes {stable_mosaic.version = 11 : i64} {
  func.func @_critic_kernel(%arg0: i32, %arg1: memref<16x128xbf16, #tpu.memory_space<vmem>>, %arg2: memref<128x256xbf16, #tpu.memory_space<vmem>>, %arg3: memref<1x256xf32, #tpu.memory_space<vmem>>, %arg4: memref<256x256xbf16, #tpu.memory_space<vmem>>, %arg5: memref<1x256xf32, #tpu.memory_space<vmem>>, %arg6: memref<1x256xf32, #tpu.memory_space<vmem>>, %arg7: memref<1x1xf32, #tpu.memory_space<vmem>>, %arg8: memref<16x128xf32, #tpu.memory_space<vmem>>) attributes {dimension_semantics = [#tpu.dimension_semantics<parallel>], iteration_bounds = array<i64: 1>, scalar_prefetch = 0 : i64, scratch_operands = 0 : i64, tpu.core_type = #tpu.core_type<tc>, window_params = [{transform_indices = @transform_0, window_bounds = array<i64: 16, 128>}, {pipeline_mode = #tpu.pipeline_mode<synchronous>, transform_indices = @transform_1, window_bounds = array<i64: 128, 256>}, {pipeline_mode = #tpu.pipeline_mode<synchronous>, transform_indices = @transform_2, window_bounds = array<i64: 1, 256>}, {pipeline_mode = #tpu.pipeline_mode<synchronous>, transform_indices = @transform_3, window_bounds = array<i64: 256, 256>}, {pipeline_mode = #tpu.pipeline_mode<synchronous>, transform_indices = @transform_4, window_bounds = array<i64: 1, 256>}, {pipeline_mode = #tpu.pipeline_mode<synchronous>, transform_indices = @transform_5, window_bounds = array<i64: 1, 256>}, {pipeline_mode = #tpu.pipeline_mode<synchronous>, transform_indices = @transform_6, window_bounds = array<i64: 1, 1>}, {transform_indices = @transform_7, window_bounds = array<i64: 16, 128>}]} {
    %c0 = arith.constant 0 : index
    %c0_0 = arith.constant 0 : index
    %0 = vector.load %arg1[%c0, %c0_0] : memref<16x128xbf16, #tpu.memory_space<vmem>>, vector<16x128xbf16>
    %c0_1 = arith.constant 0 : index
    %c0_2 = arith.constant 0 : index
    %1 = vector.load %arg2[%c0_1, %c0_2] : memref<128x256xbf16, #tpu.memory_space<vmem>>, vector<128x256xbf16>
    %cst = arith.constant dense<0.000000e+00> : vector<16x256xf32>
    %2 = tpu.matmul %0, %1, %cst {dimension_numbers = #tpu.dot_dimension_numbers<[1], [0], [0], [1], [0, 0, 1, 1], [], []>} : vector<16x128xbf16>, vector<128x256xbf16>, vector<16x256xf32> -> vector<16x256xf32>
    %c0_3 = arith.constant 0 : index
    %c0_4 = arith.constant 0 : index
    %3 = vector.load %arg3[%c0_3, %c0_4] : memref<1x256xf32, #tpu.memory_space<vmem>>, vector<1x256xf32>
    %4 = vector.broadcast %3 : vector<1x256xf32> to vector<16x256xf32>
    %5 = arith.addf %2, %4 : vector<16x256xf32>
    %cst_5 = arith.constant 0.000000e+00 : f32
    %6 = vector.broadcast %cst_5 : f32 to vector<16x256xf32>
    %7 = arith.maximumf %5, %6 : vector<16x256xf32>
    %8 = arith.truncf %7 : vector<16x256xf32> to vector<16x256xbf16>
    %c0_6 = arith.constant 0 : index
    %c0_7 = arith.constant 0 : index
    %9 = vector.load %arg4[%c0_6, %c0_7] : memref<256x256xbf16, #tpu.memory_space<vmem>>, vector<256x256xbf16>
    %cst_8 = arith.constant dense<0.000000e+00> : vector<16x256xf32>
    %10 = tpu.matmul %8, %9, %cst_8 {dimension_numbers = #tpu.dot_dimension_numbers<[1], [0], [0], [1], [0, 0, 1, 1], [], []>} : vector<16x256xbf16>, vector<256x256xbf16>, vector<16x256xf32> -> vector<16x256xf32>
    %c0_9 = arith.constant 0 : index
    %c0_10 = arith.constant 0 : index
    %11 = vector.load %arg5[%c0_9, %c0_10] : memref<1x256xf32, #tpu.memory_space<vmem>>, vector<1x256xf32>
    %12 = vector.broadcast %11 : vector<1x256xf32> to vector<16x256xf32>
    %13 = arith.addf %10, %12 : vector<16x256xf32>
    %cst_11 = arith.constant 0.000000e+00 : f32
    %14 = vector.broadcast %cst_11 : f32 to vector<16x256xf32>
    %15 = arith.maximumf %13, %14 : vector<16x256xf32>
    %c0_12 = arith.constant 0 : index
    %c0_13 = arith.constant 0 : index
    %16 = vector.load %arg6[%c0_12, %c0_13] : memref<1x256xf32, #tpu.memory_space<vmem>>, vector<1x256xf32>
    %17 = vector.broadcast %16 : vector<1x256xf32> to vector<16x256xf32>
    %18 = arith.mulf %15, %17 : vector<16x256xf32>
    %cst_14 = arith.constant dense<0.000000e+00> : vector<16xf32>
    %19 = vector.multi_reduction <add>, %18, %cst_14 [1] : vector<16x256xf32> to vector<16xf32>
    %20 = vector.shape_cast %19 : vector<16xf32> to vector<16x1xf32>
    %c0_15 = arith.constant 0 : index
    %c0_16 = arith.constant 0 : index
    %21 = vector.load %arg7[%c0_15, %c0_16] : memref<1x1xf32, #tpu.memory_space<vmem>>, vector<1x1xf32>
    %22 = vector.broadcast %21 : vector<1x1xf32> to vector<16x1xf32>
    %23 = arith.addf %20, %22 : vector<16x1xf32>
    %24 = vector.shape_cast %23 : vector<16x1xf32> to vector<16x1xf32>
    %25 = vector.broadcast %24 : vector<16x1xf32> to vector<16x128xf32>
    %c0_17 = arith.constant 0 : index
    %c0_18 = arith.constant 0 : index
    %26 = vector.load %arg8[%c0_17, %c0_18] : memref<16x128xf32, #tpu.memory_space<vmem>>, vector<16x128xf32>
    tpu.vector_store %arg8[%c0_17, %c0_18], %25 {strides = array<i32>} : memref<16x128xf32, #tpu.memory_space<vmem>>, vector<16x128xf32>,
    return
  }
  func.func @transform_0(%arg0: i32) -> (i32, i32) {
    %c0_i32 = arith.constant 0 : i32
    %c0_i32_0 = arith.constant 0 : i32
    return %arg0, %c0_i32 : i32, i32
  }
  func.func @transform_1(%arg0: i32) -> (i32, i32) {
    %c0_i32 = arith.constant 0 : i32
    %c0_i32_0 = arith.constant 0 : i32
    %c0_i32_1 = arith.constant 0 : i32
    return %c0_i32, %c0_i32_0 : i32, i32
  }
  func.func @transform_2(%arg0: i32) -> (i32, i32) {
    %c0_i32 = arith.constant 0 : i32
    %c0_i32_0 = arith.constant 0 : i32
    %c0_i32_1 = arith.constant 0 : i32
    return %c0_i32, %c0_i32_0 : i32, i32
  }
  func.func @transform_3(%arg0: i32) -> (i32, i32) {
    %c0_i32 = arith.constant 0 : i32
    %c0_i32_0 = arith.constant 0 : i32
    %c0_i32_1 = arith.constant 0 : i32
    return %c0_i32, %c0_i32_0 : i32, i32
  }
  func.func @transform_4(%arg0: i32) -> (i32, i32) {
    %c0_i32 = arith.constant 0 : i32
    %c0_i32_0 = arith.constant 0 : i32
    %c0_i32_1 = arith.constant 0 : i32
    return %c0_i32, %c0_i32_0 : i32, i32
  }
  func.func @transform_5(%arg0: i32) -> (i32, i32) {
    %c0_i32 = arith.constant 0 : i32
    %c0_i32_0 = arith.constant 0 : i32
    %c0_i32_1 = arith.constant 0 : i32
    return %c0_i32, %c0_i32_0 : i32, i32
  }
  func.func @transform_6(%arg0: i32) -> (i32, i32) {
    %c0_i32 = arith.constant 0 : i32
    %c0_i32_0 = arith.constant 0 : i32
    %c0_i32_1 = arith.constant 0 : i32
    return %c0_i32, %c0_i32_0 : i32, i32
  }
  func.func @transform_7(%arg0: i32) -> (i32, i32) {
    %c0_i32 = arith.constant 0 : i32
    %c0_i32_0 = arith.constant 0 : i32
    return %arg0, %c0_i32 : i32, i32
  }
}

</mosaic_0001>

<llo_original>
// kernel: critic_forward.1
$region0: #{critic_forward.1}
  #allocation0 [shape = 'u32[]', space=smem, size = 0x4, offset = 0x4, fixed_abs, tag = 'smem constant byte address 0x4 - core index']
  #allocation1 [shape = 'u32[144,128]{1,0:T(1,128)}', space=vmem, size = 0x12000, scoped, tag = 'internal scratch']
  #allocation2 [shape = 'f32[1,1]{1,0:T(1,128)S(1)}', space=vmem, size = 0x200, scoped, tag = 'scoped memory for critic_forward.1']
  %s0 = inlined_call_operand.vmem [shape: bf16[16,128], index: 0, kind: input, shape index: {}]
  %s1 = inlined_call_operand.hbm [shape: bf16[128,256], index: 1, kind: input, shape index: {}]
  %s2 = inlined_call_operand.vmem [shape: f32[1,256], index: 2, kind: input, shape index: {}]
  %s3 = inlined_call_operand.hbm [shape: bf16[256,256], index: 3, kind: input, shape index: {}]
  %s4 = inlined_call_operand.vmem [shape: f32[1,256], index: 4, kind: input, shape index: {}]
  %s5 = inlined_call_operand.vmem [shape: f32[1,256], index: 5, kind: input, shape index: {}]
  %s6 = inlined_call_operand.<no memory space> [shape: f32[1,1], index: 6, kind: input, shape index: {}]
  %s7 = inlined_call_operand.vmem [shape: f32[16,128], index: 7, kind: output, shape index: {}]
  %s8 = sld [smem:[#allocation0]]
  $region46: #{critic_forward.1} parent=0
    _
  %s10 = ssub.s32 1, %s8
  %s11 = scalar_select 0, %s10, %s8
  %v12 = vstv %s6
  %13 = vst [vmem:[#allocation2] sm:$0x1] %v12
  $region1: #{critic_forward.1} parent=0
    #allocation3 [shape = 'u8[65536]{0}', space=vmem, size = 0x10000, scoped, tag = 'input window, operand 1, single buffered']
    #allocation4 [shape = 's32[1]{0}', space=sflag, size = 0x4, scoped, tag = 'scoped memory for critic_forward.1']
    #allocation5 [shape = 'u8[131072]{0}', space=vmem, size = 0x20000, scoped, tag = 'input window, operand 3, single buffered']
    #allocation6 [shape = 's32[1]{0}', space=sflag, size = 0x4, scoped, tag = 'scoped memory for critic_forward.1']
    %14 = vsyncpa [#allocation4], 0
    %15 = vsyncpa [#allocation6], 0
    // Predicated region
    $region2: #{critic_forward.1} parent=1 // pred_check
      _
    $region3: #{critic_forward.1} parent=1 // pred_check_branch
      %17 = sbr.rel (0) target = $region5
    $region4: #{critic_forward.1} parent=1 // pred_region
      _
    $region5: #{critic_forward.1} parent=1 // pred_fallthru
      _
    // Predicated region
    $region6: #{critic_forward.1} parent=1 // pred_check
      _
    $region7: #{critic_forward.1} parent=1 // pred_check_branch
      %19 = sbr.rel (0) target = $region9
    $region8: #{critic_forward.1} parent=1 // pred_region
      %s21 = ssub.s32 2048, 2048
      %22 = vsyncadd [#allocation4], %s21
      %s23 = sshll.u32 [#allocation3], 4
      %s24 = int_to_ptr.vmem [resolvable:$true] %s23
      %29 = dma.hbm_to_vmem [thread:$0]  %s1, 2048, %s24, [#allocation4], 128, 128, 8
    $region9: #{critic_forward.1} parent=1 // pred_fallthru
      _
    // Predicated region
    $region10: #{critic_forward.1} parent=1 // pred_check
      _
    $region11: #{critic_forward.1} parent=1 // pred_check_branch
      %31 = sbr.rel (0) target = $region13
    $region12: #{critic_forward.1} parent=1 // pred_region
      _
    $region13: #{critic_forward.1} parent=1 // pred_fallthru
      _
    // Predicated region
    $region14: #{critic_forward.1} parent=1 // pred_check
      _
    $region15: #{critic_forward.1} parent=1 // pred_check_branch
      %33 = sbr.rel (0) target = $region17
    $region16: #{critic_forward.1} parent=1 // pred_region
      %s35 = ssub.s32 4096, 4096
      %36 = vsyncadd [#allocation6], %s35
      %s37 = sshll.u32 [#allocation5], 4
      %s38 = int_to_ptr.vmem [resolvable:$true] %s37
      %43 = dma.hbm_to_vmem [thread:$0]  %s3, 4096, %s38, [#allocation6], 128, 128, 8
    $region17: #{critic_forward.1} parent=1 // pred_fallthru
      _
    // Predicated region
    $region18: #{critic_forward.1} parent=1 // pred_check
      _
    $region19: #{critic_forward.1} parent=1 // pred_check_branch
      %45 = sbr.rel (0) target = $region21
    $region20: #{critic_forward.1} parent=1 // pred_region
      _
    $region21: #{critic_forward.1} parent=1 // pred_fallthru
      _
    // Predicated region
    $region22: #{critic_forward.1} parent=1 // pred_check
      _
    $region23: #{critic_forward.1} parent=1 // pred_check_branch
      %47 = sbr.rel (0) target = $region25
    $region24: #{critic_forward.1} parent=1 // pred_region
      _
    $region25: #{critic_forward.1} parent=1 // pred_fallthru
      _
    // Predicated region
    $region26: #{critic_forward.1} parent=1 // pred_check
      _
    $region27: #{critic_forward.1} parent=1 // pred_check_branch
      %49 = sbr.rel (0) target = $region29
    $region28: #{critic_forward.1} parent=1 // pred_region
      _
    $region29: #{critic_forward.1} parent=1 // pred_fallthru
      _
    // Predicated region
    $region30: #{critic_forward.1} parent=1 // pred_check
      _
    $region31: #{critic_forward.1} parent=1 // pred_check_branch
      %51 = sbr.rel (0) target = $region33
    $region32: #{critic_forward.1} parent=1 // pred_region
      %52 = dma.done [#allocation4], 2048
    $region33: #{critic_forward.1} parent=1 // pred_fallthru
      _
    // Predicated region
    $region34: #{critic_forward.1} parent=1 // pred_check
      _
    $region35: #{critic_forward.1} parent=1 // pred_check_branch
      %54 = sbr.rel (0) target = $region37
    $region36: #{critic_forward.1} parent=1 // pred_region
      %55 = dma.done [#allocation6], 4096
    $region37: #{critic_forward.1} parent=1 // pred_fallthru
      _
    %v57 = vld [vmem:[%s0] sm:$0xf]
    %v58 = vld [vmem:[%s0 + $0x4] sm:$0xf]
    %v59 = vld [vmem:[#allocation3] sm:$0xff]
    %v60 = vld [vmem:[#allocation3 + $0x8] sm:$0xff]
    %v61 = vld [vmem:[#allocation3 + $0x10] sm:$0xff]
    %v62 = vld [vmem:[#allocation3 + $0x18] sm:$0xff]
    %v63 = vld [vmem:[#allocation3 + $0x20] sm:$0xff]
    %v64 = vld [vmem:[#allocation3 + $0x28] sm:$0xff]
    %v65 = vld [vmem:[#allocation3 + $0x30] sm:$0xff]
    %v66 = vld [vmem:[#allocation3 + $0x38] sm:$0xff]
    %v67 = vld [vmem:[#allocation3 + $0x40] sm:$0xff]
    %v68 = vld [vmem:[#allocation3 + $0x48] sm:$0xff]
    %v69 = vld [vmem:[#allocation3 + $0x50] sm:$0xff]
    %v70 = vld [vmem:[#allocation3 + $0x58] sm:$0xff]
    %v71 = vld [vmem:[#allocation3 + $0x60] sm:$0xff]
    %v72 = vld [vmem:[#allocation3 + $0x68] sm:$0xff]
    %v73 = vld [vmem:[#allocation3 + $0x70] sm:$0xff]
    %v74 = vld [vmem:[#allocation3 + $0x78] sm:$0xff]
    %v75 = vld [vmem:[%s2] sm:$0x3]
    %v77 = vlaneseq
    %v78 = vshrl.u32 %v77, 7
    %v79 = vsub.s32 0, %v78
    %v80 = vrot.slane %v75, %v79
    %v81 = vlaneseq
    %v82 = vshrl.u32 %v81, 7
    %v83 = vsub.s32 1, %v82
    %v84 = vrot.slane %v75, %v83
    %v89 = vunpack.c.l.b16 %v57
    %v90 = vunpack.c.l.b16 %v58
    %v91 = vpack.c.b16 %v90, %v89
    %v109 = vunpack.c.l.b16 %v59
    %v110 = vunpack.c.h.b16 %v59
    %v111 = vunpack.c.l.b16 %v60
    %v112 = vunpack.c.h.b16 %v60
    %v113 = vunpack.c.l.b16 %v61
    %v114 = vunpack.c.h.b16 %v61
    %v115 = vunpack.c.l.b16 %v62
    %v116 = vunpack.c.h.b16 %v62
    %v117 = vunpack.c.l.b16 %v63
    %v118 = vunpack.c.h.b16 %v63
    %v119 = vunpack.c.l.b16 %v64
    %v120 = vunpack.c.h.b16 %v64
    %v121 = vunpack.c.l.b16 %v65
    %v122 = vunpack.c.h.b16 %v65
    %v123 = vunpack.c.l.b16 %v66
    %v124 = vunpack.c.h.b16 %v66
    %v125 = vunpack.c.l.b16 %v67
    %v126 = vunpack.c.h.b16 %v67
    %v127 = vunpack.c.l.b16 %v68
    %v128 = vunpack.c.h.b16 %v68
    %v129 = vunpack.c.l.b16 %v69
    %v130 = vunpack.c.h.b16 %v69
    %v131 = vunpack.c.l.b16 %v70
    %v132 = vunpack.c.h.b16 %v70
    %v133 = vunpack.c.l.b16 %v71
    %v134 = vunpack.c.h.b16 %v71
    %v135 = vunpack.c.l.b16 %v72
    %v136 = vunpack.c.h.b16 %v72
    %v137 = vunpack.c.l.b16 %v73
    %v138 = vunpack.c.h.b16 %v73
    %v139 = vunpack.c.l.b16 %v74
    %v140 = vunpack.c.h.b16 %v74
    %v141 = vpack.c.b16 %v111, %v109
    %v142 = vpack.c.b16 %v112, %v110
    %v143 = vpack.c.b16 %v115, %v113
    %v144 = vpack.c.b16 %v116, %v114
    %v145 = vpack.c.b16 %v119, %v117
    %v146 = vpack.c.b16 %v120, %v118
    %v147 = vpack.c.b16 %v123, %v121
    %v148 = vpack.c.b16 %v124, %v122
    %v149 = vpack.c.b16 %v127, %v125
    %v150 = vpack.c.b16 %v128, %v126
    %v151 = vpack.c.b16 %v131, %v129
    %v152 = vpack.c.b16 %v132, %v130
    %v153 = vpack.c.b16 %v135, %v133
    %v154 = vpack.c.b16 %v136, %v134
    %v155 = vpack.c.b16 %v139, %v137
    %v156 = vpack.c.b16 %v140, %v138
    %173 = vmatprep.subr.bf16.mxu0 %v142
    %174 = vmatpush1.bf16.msra.mxu0 %v141
    %175 = vmatprep.subr.bf16.mxu0 %v144
    %176 = vmatpush1.bf16.msra.mxu0 %v143
    %177 = vmatprep.subr.bf16.mxu0 %v146
    %178 = vmatpush1.bf16.msra.mxu0 %v145
    %179 = vmatprep.subr.bf16.mxu0 %v148
    %180 = vmatpush1.bf16.msra.mxu0 %v147
    %181 = vmatprep.subr.bf16.mxu0 %v150
    %182 = vmatpush1.bf16.msra.mxu0 %v149
    %183 = vmatprep.subr.bf16.mxu0 %v152
    %184 = vmatpush1.bf16.msra.mxu0 %v151
    %185 = vmatprep.subr.bf16.mxu0 %v154
    %186 = vmatpush1.bf16.msra.mxu0 %v153
    %187 = vmatprep.subr.bf16.mxu0 %v156
    %188 = vmatpush1.bf16.msra.mxu0 %v155
    %189 = vmatprep.subr.bf16.mxu0 0
    %190 = vmatpush1.bf16.msra.mxu0 0
    %191 = vmatprep.subr.bf16.mxu0 0
    %192 = vmatpush1.bf16.msra.mxu0 0
    %193 = vmatprep.subr.bf16.mxu0 0
    %194 = vmatpush1.bf16.msra.mxu0 0
    %195 = vmatprep.subr.bf16.mxu0 0
    %196 = vmatpush1.bf16.msra.mxu0 0
    %197 = vmatprep.subr.bf16.mxu0 0
    %198 = vmatpush1.bf16.msra.mxu0 0
    %199 = vmatprep.subr.bf16.mxu0 0
    %200 = vmatpush1.bf16.msra.mxu0 0
    %201 = vmatprep.subr.bf16.mxu0 0
    %202 = vmatpush1.bf16.msra.mxu0 0
    %203 = vmatprep.subr.bf16.mxu0 0
    %204 = vmatpush1.bf16.msra.mxu0 0
    %205 = vmatprep.mubr.bf16.mxu0 0
    %206 = vmatmul.mubr.bf16.gmra.mrb[0].mxu0 %v91
    %v207 = vpop.f32.mrb[0].mxu0
    %v208 = vadd.f32 %v80, %v207
    %v209 = vpop.f32.mrb[0].mxu0
    %v210 = vadd.f32 %v84, %v209
    %v211 = vpop.f32.mrb[0].mxu0
    %v212 = vadd.f32 %v80, %v211
    %v213 = vpop.f32.mrb[0].mxu0
    %v214 = vadd.f32 %v84, %v213
    %215 = vdwg.mxu0
    %v216 = vmax.f32 %v208, 0.0
    %v217 = vmax.f32 %v210, 0.0
    %v218 = vmax.f32 %v212, 0.0
    %v219 = vmax.f32 %v214, 0.0
    %v220 = vpack.c.bf16 %v218, %v216
    %v221 = vpack.c.bf16 %v219, %v217
    %v222 = vld [vmem:[#allocation5] sm:$0xff]
    %v223 = vld [vmem:[#allocation5 + $0x8] sm:$0xff]
    %v224 = vld [vmem:[#allocation5 + $0x10] sm:$0xff]
    %v225 = vld [vmem:[#allocation5 + $0x18] sm:$0xff]
    %v226 = vld [vmem:[#allocation5 + $0x20] sm:$0xff]
    %v227 = vld [vmem:[#allocation5 + $0x28] sm:$0xff]
    %v228 = vld [vmem:[#allocation5 + $0x30] sm:$0xff]
    %v229 = vld [vmem:[#allocation5 + $0x38] sm:$0xff]
    %v230 = vld [vmem:[#allocation5 + $0x40] sm:$0xff]
    %v231 = vld [vmem:[#allocation5 + $0x48] sm:$0xff]
    %v232 = vld [vmem:[#allocation5 + $0x50] sm:$0xff]
    %v233 = vld [vmem:[#allocation5 + $0x58] sm:$0xff]
    %v234 = vld [vmem:[#allocation5 + $0x60] sm:$0xff]
    %v235 = vld [vmem:[#allocation5 + $0x68] sm:$0xff]
    %v236 = vld [vmem:[#allocation5 + $0x70] sm:$0xff]
    %v237 = vld [vmem:[#allocation5 + $0x78] sm:$0xff]
    %v238 = vld [vmem:[#allocation5 + $0x80] sm:$0xff]
    %v239 = vld [vmem:[#allocation5 + $0x88] sm:$0xff]
    %v240 = vld [vmem:[#allocation5 + $0x90] sm:$0xff]
    %v241 = vld [vmem:[#allocation5 + $0x98] sm:$0xff]
    %v242 = vld [vmem:[#allocation5 + $0xa0] sm:$0xff]
    %v243 = vld [vmem:[#allocation5 + $0xa8] sm:$0xff]
    %v244 = vld [vmem:[#allocation5 + $0xb0] sm:$0xff]
    %v245 = vld [vmem:[#allocation5 + $0xb8] sm:$0xff]
    %v246 = vld [vmem:[#allocation5 + $0xc0] sm:$0xff]
    %v247 = vld [vmem:[#allocation5 + $0xc8] sm:$0xff]
    %v248 = vld [vmem:[#allocation5 + $0xd0] sm:$0xff]
    %v249 = vld [vmem:[#allocation5 + $0xd8] sm:$0xff]
    %v250 = vld [vmem:[#allocation5 + $0xe0] sm:$0xff]
    %v251 = vld [vmem:[#allocation5 + $0xe8] sm:$0xff]
    %v252 = vld [vmem:[#allocation5 + $0xf0] sm:$0xff]
    %v253 = vld [vmem:[#allocation5 + $0xf8] sm:$0xff]
    %v254 = vld [vmem:[%s4] sm:$0x3]
    %v256 = vlaneseq
    %v257 = vshrl.u32 %v256, 7
    %v258 = vsub.s32 0, %v257
    %v259 = vrot.slane %v254, %v258
    %v260 = vlaneseq
    %v261 = vshrl.u32 %v260, 7
    %v262 = vsub.s32 1, %v261
    %v263 = vrot.slane %v254, %v262
    %v298 = vunpack.c.l.b16 %v222
    %v299 = vunpack.c.h.b16 %v222
    %v300 = vunpack.c.l.b16 %v223
    %v301 = vunpack.c.h.b16 %v223
    %v302 = vunpack.c.l.b16 %v224
    %v303 = vunpack.c.h.b16 %v224
    %v304 = vunpack.c.l.b16 %v225
    %v305 = vunpack.c.h.b16 %v225
    %v306 = vunpack.c.l.b16 %v226
    %v307 = vunpack.c.h.b16 %v226
    %v308 = vunpack.c.l.b16 %v227
    %v309 = vunpack.c.h.b16 %v227
    %v310 = vunpack.c.l.b16 %v228
    %v311 = vunpack.c.h.b16 %v228
    %v312 = vunpack.c.l.b16 %v229
    %v313 = vunpack.c.h.b16 %v229
    %v314 = vunpack.c.l.b16 %v230
    %v315 = vunpack.c.h.b16 %v230
    %v316 = vunpack.c.l.b16 %v231
    %v317 = vunpack.c.h.b16 %v231
    %v318 = vunpack.c.l.b16 %v232
    %v319 = vunpack.c.h.b16 %v232
    %v320 = vunpack.c.l.b16 %v233
    %v321 = vunpack.c.h.b16 %v233
    %v322 = vunpack.c.l.b16 %v234
    %v323 = vunpack.c.h.b16 %v234
    %v324 = vunpack.c.l.b16 %v235
    %v325 = vunpack.c.h.b16 %v235
    %v326 = vunpack.c.l.b16 %v236
    %v327 = vunpack.c.h.b16 %v236
    %v328 = vunpack.c.l.b16 %v237
    %v329 = vunpack.c.h.b16 %v237
    %v330 = vunpack.c.l.b16 %v238
    %v331 = vunpack.c.h.b16 %v238
    %v332 = vunpack.c.l.b16 %v239
    %v333 = vunpack.c.h.b16 %v239
    %v334 = vunpack.c.l.b16 %v240
    %v335 = vunpack.c.h.b16 %v240
    %v336 = vunpack.c.l.b16 %v241
    %v337 = vunpack.c.h.b16 %v241
    %v338 = vunpack.c.l.b16 %v242
    %v339 = vunpack.c.h.b16 %v242
    %v340 = vunpack.c.l.b16 %v243
    %v341 = vunpack.c.h.b16 %v243
    %v342 = vunpack.c.l.b16 %v244
    %v343 = vunpack.c.h.b16 %v244
    %v344 = vunpack.c.l.b16 %v245
    %v345 = vunpack.c.h.b16 %v245
    %v346 = vunpack.c.l.b16 %v246
    %v347 = vunpack.c.h.b16 %v246
    %v348 = vunpack.c.l.b16 %v247
    %v349 = vunpack.c.h.b16 %v247
    %v350 = vunpack.c.l.b16 %v248
    %v351 = vunpack.c.h.b16 %v248
    %v352 = vunpack.c.l.b16 %v249
    %v353 = vunpack.c.h.b16 %v249
    %v354 = vunpack.c.l.b16 %v250
    %v355 = vunpack.c.h.b16 %v250
    %v356 = vunpack.c.l.b16 %v251
    %v357 = vunpack.c.h.b16 %v251
    %v358 = vunpack.c.l.b16 %v252
    %v359 = vunpack.c.h.b16 %v252
    %v360 = vunpack.c.l.b16 %v253
    %v361 = vunpack.c.h.b16 %v253
    %v362 = vpack.c.b16 %v300, %v298
    %v363 = vpack.c.b16 %v301, %v299
    %v364 = vpack.c.b16 %v304, %v302
    %v365 = vpack.c.b16 %v305, %v303
    %v366 = vpack.c.b16 %v308, %v306
    %v367 = vpack.c.b16 %v309, %v307
    %v368 = vpack.c.b16 %v312, %v310
    %v369 = vpack.c.b16 %v313, %v311
    %v370 = vpack.c.b16 %v316, %v314
    %v371 = vpack.c.b16 %v317, %v315
    %v372 = vpack.c.b16 %v320, %v318
    %v373 = vpack.c.b16 %v321, %v319
    %v374 = vpack.c.b16 %v324, %v322
    %v375 = vpack.c.b16 %v325, %v323
    %v376 = vpack.c.b16 %v328, %v326
    %v377 = vpack.c.b16 %v329, %v327
    %v378 = vpack.c.b16 %v332, %v330
    %v379 = vpack.c.b16 %v333, %v331
    %v380 = vpack.c.b16 %v336, %v334
    %v381 = vpack.c.b16 %v337, %v335
    %v382 = vpack.c.b16 %v340, %v338
    %v383 = vpack.c.b16 %v341, %v339
    %v384 = vpack.c.b16 %v344, %v342
    %v385 = vpack.c.b16 %v345, %v343
    %v386 = vpack.c.b16 %v348, %v346
    %v387 = vpack.c.b16 %v349, %v347
    %v388 = vpack.c.b16 %v352, %v350
    %v389 = vpack.c.b16 %v353, %v351
    %v390 = vpack.c.b16 %v356, %v354
    %v391 = vpack.c.b16 %v357, %v355
    %v392 = vpack.c.b16 %v360, %v358
    %v393 = vpack.c.b16 %v361, %v359
    %426 = vmatprep.subr.bf16.mxu0 %v363
    %427 = vmatpush1.bf16.msra.mxu0 %v362
    %428 = vmatprep.subr.bf16.mxu0 %v365
    %429 = vmatpush1.bf16.msra.mxu0 %v364
    %430 = vmatprep.subr.bf16.mxu0 %v367
    %431 = vmatpush1.bf16.msra.mxu0 %v366
    %432 = vmatprep.subr.bf16.mxu0 %v369
    %433 = vmatpush1.bf16.msra.mxu0 %v368
    %434 = vmatprep.subr.bf16.mxu0 %v371
    %435 = vmatpush1.bf16.msra.mxu0 %v370
    %436 = vmatprep.subr.bf16.mxu0 %v373
    %437 = vmatpush1.bf16.msra.mxu0 %v372
    %438 = vmatprep.subr.bf16.mxu0 %v375
    %439 = vmatpush1.bf16.msra.mxu0 %v374
    %440 = vmatprep.subr.bf16.mxu0 %v377
    %441 = vmatpush1.bf16.msra.mxu0 %v376
    %442 = vmatprep.subr.bf16.mxu0 %v379
    %443 = vmatpush1.bf16.msra.mxu0 %v378
    %444 = vmatprep.subr.bf16.mxu0 %v381
    %445 = vmatpush1.bf16.msra.mxu0 %v380
    %446 = vmatprep.subr.bf16.mxu0 %v383
    %447 = vmatpush1.bf16.msra.mxu0 %v382
    %448 = vmatprep.subr.bf16.mxu0 %v385
    %449 = vmatpush1.bf16.msra.mxu0 %v384
    %450 = vmatprep.subr.bf16.mxu0 %v387
    %451 = vmatpush1.bf16.msra.mxu0 %v386
    %452 = vmatprep.subr.bf16.mxu0 %v389
    %453 = vmatpush1.bf16.msra.mxu0 %v388
    %454 = vmatprep.subr.bf16.mxu0 %v391
    %455 = vmatpush1.bf16.msra.mxu0 %v390
    %456 = vmatprep.subr.bf16.mxu0 %v393
    %457 = vmatpush1.bf16.msra.mxu0 %v392
    %458 = vmatprep.mubr.bf16.mxu0 %v221
    %459 = vmatmul.mubr.bf16.gmra.mrb[0].mxu0 %v220
    %v460 = vpop.f32.mrb[0].mxu0
    %v461 = vadd.f32 %v259, %v460
    %v462 = vpop.f32.mrb[0].mxu0
    %v463 = vadd.f32 %v263, %v462
    %v464 = vpop.f32.mrb[0].mxu0
    %v465 = vadd.f32 %v259, %v464
    %v466 = vpop.f32.mrb[0].mxu0
    %v467 = vadd.f32 %v263, %v466
    %468 = vdwg.mxu0
    %v469 = vmax.f32 %v461, 0.0
    %v470 = vmax.f32 %v463, 0.0
    %v471 = vmax.f32 %v465, 0.0
    %v472 = vmax.f32 %v467, 0.0
    %v473 = vld [vmem:[%s5] sm:$0x3]
    %v475 = vlaneseq
    %v476 = vshrl.u32 %v475, 7
    %v477 = vsub.s32 0, %v476
    %v478 = vrot.slane %v473, %v477
    %v479 = vlaneseq
    %v480 = vshrl.u32 %v479, 7
    %v481 = vsub.s32 1, %v480
    %v482 = vrot.slane %v473, %v481
    %v485 = vmul.f32 %v469, %v478
    %v486 = vmul.f32 %v470, %v482
    %v487 = vmul.f32 %v471, %v478
    %v488 = vmul.f32 %v472, %v482
    %v489 = vadd.f32 %v485, %v486
    %490 = vadd.xlane.f32.xlu0 %v489
    %v491 = vpop.xlane.xlu0 %490
    %v492 = vadd.f32 %v487, %v488
    %493 = vadd.xlane.f32.xlu0 %v492
    %v494 = vpop.xlane.xlu0 %493
    %v495 = vld [vmem:[#allocation2] sm:$0x1]
    %v497 = vlaneseq
    %v498 = vshrl.u32 %v497, 7
    %v499 = vsub.s32 0, %v498
    %v500 = vrot.slane %v495, %v499
    %v502 = vadd.f32 %v491, %v500
    %v503 = vadd.f32 %v494, %v500
    %505 = vset.pattern.permute.xlu0 0
    %506 = vperm.xlu0 %505, %v502
    %v507 = vpop.permute.xlu0 %506
    %510 = vset.pattern.permute.xlu0 0
    %511 = vperm.xlu0 %510, %v503
    %v512 = vpop.permute.xlu0 %511
    %514 = vst [vmem:[%s7] sm:$0xff] %v507
    %515 = vst [vmem:[%s7 + $0x8] sm:$0xff] %v512
    // Predicated region
    $region38: #{critic_forward.1} parent=1 // pred_check
      _
    $region39: #{critic_forward.1} parent=1 // pred_check_branch
      %517 = sbr.rel (0) target = $region41
    $region40: #{critic_forward.1} parent=1 // pred_region
      _
    $region41: #{critic_forward.1} parent=1 // pred_fallthru
      _
    // Predicated region
    $region42: #{critic_forward.1} parent=1 // pred_check
      _
    $region43: #{critic_forward.1} parent=1 // pred_check_branch
      %519 = sbr.rel (0) target = $region45
    $region44: #{critic_forward.1} parent=1 // pred_region
      _
    $region45: #{critic_forward.1} parent=1 // pred_fallthru
      _
    %520 = vsyncpa [#allocation4], 1
    %521 = vsyncpa [#allocation6], 1

</llo_original>
